<compile_context>
chip_gen: v5e
topology: v5e:2x2
jax: 0.10.0
libtpu: 0.0.40
codegen_flags: <defaults>
</compile_context>

<pallas_src>
import functools

import jax
import jax.numpy as jnp
from jax.experimental import pallas as pl
from jax.experimental.pallas import tpu as pltpu

LANE = 128
SUBLANE = 8


def _round_up(x, m):
    return ((x + m - 1) // m) * m


def dqn_kernel(x_ref,
               w1_ref, b1_ref,
               w2_ref, b2_ref,
               w3_ref, b3_ref,
               w4_ref, b4_ref,
               o_ref):
    # Input arrives f32; cast to bf16 in-register right before the MXU so the
    # wrapper does not need a separate XLA pass over HBM for the cast.
    x = x_ref[...].astype(jnp.bfloat16)

    # All matmuls: bf16 operands on the MXU with f32 accumulation.
    # Bias-add / ReLU epilogues stay f32 on the VPU (v5e has no bf16 VALU).
    h = jnp.dot(x, w1_ref[...], preferred_element_type=jnp.float32)
    h = jnp.maximum(h + b1_ref[...], 0.0)

    h = jnp.dot(h.astype(jnp.bfloat16), w2_ref[...],
                preferred_element_type=jnp.float32)
    h = jnp.maximum(h + b2_ref[...], 0.0)

    h = jnp.dot(h.astype(jnp.bfloat16), w3_ref[...],
                preferred_element_type=jnp.float32)
    h = jnp.maximum(h + b3_ref[...], 0.0)

    out = jnp.dot(h.astype(jnp.bfloat16), w4_ref[...],
                  preferred_element_type=jnp.float32)
    o_ref[...] = (out + b4_ref[...]).astype(o_ref.dtype)


def prepare_params(params):
    """One-time conversion of [(W, b), ...] (W shape (in, out)) into kernel operands.

    Returns (flat_args, out_size): weights cast to bf16, biases as f32 (1, N) rows,
    and the last layer padded out to a multiple of 128 lanes for lane-dense stores.
    Call once and reuse across forward calls (avoids per-call conversion launches).
    """
    out_size = int(params[-1][0].shape[1])
    out_pad = _round_up(out_size, LANE)
    flat = []
    n_layers = len(params)
    for li, (w, b) in enumerate(params):
        w_c = jnp.asarray(w)
        b_c = jnp.asarray(b).reshape(1, -1)
        if li == n_layers - 1 and out_pad != out_size:
            w_c = jnp.pad(w_c, ((0, 0), (0, out_pad - out_size)))
            b_c = jnp.pad(b_c, ((0, 0), (0, out_pad - out_size)))
        flat.append(w_c.astype(jnp.bfloat16))
        flat.append(b_c.astype(jnp.float32))
    return tuple(flat), out_size


def _choose_tiling(B, block_b):
    """Balanced batch tiles: pad waste bounded by ~8*n_tiles rows, and >=2 grid
    steps whenever the batch allows (so v7x's two TensorCores both get work)."""
    if B < 2 * SUBLANE:
        return B, B, 1  # single full-array tile, no padding
    n_tiles = max(2, pl.cdiv(B, block_b))
    tb = _round_up(pl.cdiv(B, n_tiles), SUBLANE)
    b_pad = tb * n_tiles
    return tb, b_pad, n_tiles


@functools.partial(jax.jit, static_argnames=("out_size", "block_b"))
def dqn_forward(x, flat_params, *, out_size, block_b=2048):
    """x: (B, input_size) f32; flat_params: output of prepare_params()[0]."""
    B, in_size = x.shape
    out_pad = flat_params[-1].shape[1]

    tb, b_pad, n_tiles = _choose_tiling(B, block_b)
    x_p = x if b_pad == B else jnp.pad(x, ((0, b_pad - B), (0, 0)))

    in_specs = [pl.BlockSpec((tb, in_size), lambda i: (i, 0))]
    for a in flat_params:
        # Full-array blocks with constant block index -> weights/biases stay
        # VMEM-resident across batch tiles instead of being re-DMA'd each step.
        in_specs.append(pl.BlockSpec(a.shape, lambda i: (0, 0)))

    out_spec = pl.BlockSpec((tb, out_pad), lambda i: (i, 0))

    weights = flat_params[0::2]
    flops = 2 * b_pad * sum(int(w.shape[0]) * int(w.shape[1]) for w in weights)
    bytes_accessed = (
        int(x_p.size) * 4
        + sum(int(a.size) * a.dtype.itemsize for a in flat_params)
        + b_pad * out_pad * 4
    )

    out_padded = pl.pallas_call(
        dqn_kernel,
        out_shape=jax.ShapeDtypeStruct((b_pad, out_pad), jnp.float32),
        grid_spec=pltpu.PrefetchScalarGridSpec(
            num_scalar_prefetch=0,
            grid=(n_tiles,),
            in_specs=in_specs,
            out_specs=out_spec,
        ),
        compiler_params=pltpu.CompilerParams(
            dimension_semantics=("parallel",),
            # tb=2048 intermediates are ~16-20 MiB; raise the scoped limit so the
            # large tile is legal on v5e's 16 MiB default (still << v7x's 64 MiB).
            vmem_limit_bytes=64 * 1024 * 1024,
        ),
        cost_estimate=pl.CostEstimate(
            flops=flops, transcendentals=0, bytes_accessed=bytes_accessed),
    )(x_p, *flat_params)

    return out_padded[:B, :out_size]


def init_params(key, input_size, output_size):
    """Deterministic init matching nn.Linear shapes (weights stored transposed)."""
    sizes = [(input_size, 512), (512, 256), (256, 128), (128, output_size)]
    params = []
    for fan_in, fan_out in sizes:
        key, kw, kb = jax.random.split(key, 3)
        bound = 1.0 / jnp.sqrt(fan_in)
        w = jax.random.uniform(kw, (fan_in, fan_out), jnp.float32, -bound, bound)
        b = jax.random.uniform(kb, (fan_out,), jnp.float32, -bound, bound)
        params.append((w, b))
    return params


def reference_forward(x, params):
    h = x
    for i, (w, b) in enumerate(params):
        h = h @ w + b
        if i < len(params) - 1:
            h = jnp.maximum(h, 0.0)
    return h


if __name__ == "__main__":
    key = jax.random.PRNGKey(0)
    input_size = 32
    output_size = 8

    kx1, kx2, kp = jax.random.split(key, 3)
    params = init_params(kp, input_size, output_size)

    # One-time param prep (bf16 weights, padded last layer) reused across calls.
    flat_params, out_size = prepare_params(params)

    # Case 1: tiny inference-style batch (single full-array tile, no padding).
    x_small = jax.random.normal(kx1, (8, input_size), jnp.float32)
    out_small = jax.block_until_ready(
        dqn_forward(x_small, flat_params, out_size=out_size))
    ref_small = reference_forward(x_small, params)
    assert out_small.shape == (8, output_size)
    # bf16 matmul operands with f32 accumulation -> looser tolerance vs f32 ref.
    assert jnp.allclose(out_small, ref_small, atol=5e-2, rtol=5e-2)

    # Case 2: multi-tile batch; balanced tiling (3 tiles of 96 for B=272) keeps
    # padding waste small and exercises the parallel grid axis.
    x_big = jax.random.normal(kx2, (272, input_size), jnp.float32)
    out_big = jax.block_until_ready(
        dqn_forward(x_big, flat_params, out_size=out_size, block_b=128))
    ref_big = reference_forward(x_big, params)
    assert out_big.shape == (272, output_size)
    assert jnp.allclose(out_big, ref_big, atol=5e-2, rtol=5e-2)

    print("KERNEL_OK")
</pallas_src>

<mosaic_0001>
module attributes {stable_mosaic.version = 11 : i64} {
  func.func @dqn_kernel(%arg0: i32, %arg1: memref<8x32xf32, #tpu.memory_space<vmem>>, %arg2: memref<32x512xbf16, #tpu.memory_space<vmem>>, %arg3: memref<1x512xf32, #tpu.memory_space<vmem>>, %arg4: memref<512x256xbf16, #tpu.memory_space<vmem>>, %arg5: memref<1x256xf32, #tpu.memory_space<vmem>>, %arg6: memref<256x128xbf16, #tpu.memory_space<vmem>>, %arg7: memref<1x128xf32, #tpu.memory_space<vmem>>, %arg8: memref<128x128xbf16, #tpu.memory_space<vmem>>, %arg9: memref<1x128xf32, #tpu.memory_space<vmem>>, %arg10: memref<8x128xf32, #tpu.memory_space<vmem>>) attributes {dimension_semantics = [#tpu.dimension_semantics<parallel>], iteration_bounds = array<i64: 1>, scalar_prefetch = 0 : i64, scratch_operands = 0 : i64, tpu.core_type = #tpu.core_type<tc>, window_params = [{transform_indices = @transform_0, window_bounds = array<i64: 8, 32>}, {pipeline_mode = #tpu.pipeline_mode<synchronous>, transform_indices = @transform_1, window_bounds = array<i64: 32, 512>}, {pipeline_mode = #tpu.pipeline_mode<synchronous>, transform_indices = @transform_2, window_bounds = array<i64: 1, 512>}, {pipeline_mode = #tpu.pipeline_mode<synchronous>, transform_indices = @transform_3, window_bounds = array<i64: 512, 256>}, {pipeline_mode = #tpu.pipeline_mode<synchronous>, transform_indices = @transform_4, window_bounds = array<i64: 1, 256>}, {pipeline_mode = #tpu.pipeline_mode<synchronous>, transform_indices = @transform_5, window_bounds = array<i64: 256, 128>}, {pipeline_mode = #tpu.pipeline_mode<synchronous>, transform_indices = @transform_6, window_bounds = array<i64: 1, 128>}, {pipeline_mode = #tpu.pipeline_mode<synchronous>, transform_indices = @transform_7, window_bounds = array<i64: 128, 128>}, {pipeline_mode = #tpu.pipeline_mode<synchronous>, transform_indices = @transform_8, window_bounds = array<i64: 1, 128>}, {transform_indices = @transform_9, window_bounds = array<i64: 8, 128>}]} {
    %c0 = arith.constant 0 : index
    %c0_0 = arith.constant 0 : index
    %0 = vector.load %arg1[%c0, %c0_0] : memref<8x32xf32, #tpu.memory_space<vmem>>, vector<8x32xf32>
    %1 = arith.truncf %0 : vector<8x32xf32> to vector<8x32xbf16>
    %c0_1 = arith.constant 0 : index
    %c0_2 = arith.constant 0 : index
    %2 = vector.load %arg2[%c0_1, %c0_2] : memref<32x512xbf16, #tpu.memory_space<vmem>>, vector<32x512xbf16>
    %cst = arith.constant dense<0.000000e+00> : vector<8x512xf32>
    %3 = tpu.matmul %1, %2, %cst {dimension_numbers = #tpu.dot_dimension_numbers<[1], [0], [0], [1], [0, 0, 1, 1], [], []>} : vector<8x32xbf16>, vector<32x512xbf16>, vector<8x512xf32> -> vector<8x512xf32>
    %c0_3 = arith.constant 0 : index
    %c0_4 = arith.constant 0 : index
    %4 = vector.load %arg3[%c0_3, %c0_4] : memref<1x512xf32, #tpu.memory_space<vmem>>, vector<1x512xf32>
    %5 = vector.broadcast %4 : vector<1x512xf32> to vector<8x512xf32>
    %6 = arith.addf %3, %5 : vector<8x512xf32>
    %cst_5 = arith.constant 0.000000e+00 : f32
    %7 = vector.broadcast %cst_5 : f32 to vector<8x512xf32>
    %8 = arith.maximumf %6, %7 : vector<8x512xf32>
    %9 = arith.truncf %8 : vector<8x512xf32> to vector<8x512xbf16>
    %c0_6 = arith.constant 0 : index
    %c0_7 = arith.constant 0 : index
    %10 = vector.load %arg4[%c0_6, %c0_7] : memref<512x256xbf16, #tpu.memory_space<vmem>>, vector<512x256xbf16>
    %cst_8 = arith.constant dense<0.000000e+00> : vector<8x256xf32>
    %11 = tpu.matmul %9, %10, %cst_8 {dimension_numbers = #tpu.dot_dimension_numbers<[1], [0], [0], [1], [0, 0, 1, 1], [], []>} : vector<8x512xbf16>, vector<512x256xbf16>, vector<8x256xf32> -> vector<8x256xf32>
    %c0_9 = arith.constant 0 : index
    %c0_10 = arith.constant 0 : index
    %12 = vector.load %arg5[%c0_9, %c0_10] : memref<1x256xf32, #tpu.memory_space<vmem>>, vector<1x256xf32>
    %13 = vector.broadcast %12 : vector<1x256xf32> to vector<8x256xf32>
    %14 = arith.addf %11, %13 : vector<8x256xf32>
    %cst_11 = arith.constant 0.000000e+00 : f32
    %15 = vector.broadcast %cst_11 : f32 to vector<8x256xf32>
    %16 = arith.maximumf %14, %15 : vector<8x256xf32>
    %17 = arith.truncf %16 : vector<8x256xf32> to vector<8x256xbf16>
    %c0_12 = arith.constant 0 : index
    %c0_13 = arith.constant 0 : index
    %18 = vector.load %arg6[%c0_12, %c0_13] : memref<256x128xbf16, #tpu.memory_space<vmem>>, vector<256x128xbf16>
    %cst_14 = arith.constant dense<0.000000e+00> : vector<8x128xf32>
    %19 = tpu.matmul %17, %18, %cst_14 {dimension_numbers = #tpu.dot_dimension_numbers<[1], [0], [0], [1], [0, 0, 1, 1], [], []>} : vector<8x256xbf16>, vector<256x128xbf16>, vector<8x128xf32> -> vector<8x128xf32>
    %c0_15 = arith.constant 0 : index
    %c0_16 = arith.constant 0 : index
    %20 = vector.load %arg7[%c0_15, %c0_16] : memref<1x128xf32, #tpu.memory_space<vmem>>, vector<1x128xf32>
    %21 = vector.broadcast %20 : vector<1x128xf32> to vector<8x128xf32>
    %22 = arith.addf %19, %21 : vector<8x128xf32>
    %cst_17 = arith.constant 0.000000e+00 : f32
    %23 = vector.broadcast %cst_17 : f32 to vector<8x128xf32>
    %24 = arith.maximumf %22, %23 : vector<8x128xf32>
    %25 = arith.truncf %24 : vector<8x128xf32> to vector<8x128xbf16>
    %c0_18 = arith.constant 0 : index
    %c0_19 = arith.constant 0 : index
    %26 = vector.load %arg8[%c0_18, %c0_19] : memref<128x128xbf16, #tpu.memory_space<vmem>>, vector<128x128xbf16>
    %cst_20 = arith.constant dense<0.000000e+00> : vector<8x128xf32>
    %27 = tpu.matmul %25, %26, %cst_20 {dimension_numbers = #tpu.dot_dimension_numbers<[1], [0], [0], [1], [0, 0, 1, 1], [], []>} : vector<8x128xbf16>, vector<128x128xbf16>, vector<8x128xf32> -> vector<8x128xf32>
    %c0_21 = arith.constant 0 : index
    %c0_22 = arith.constant 0 : index
    %28 = vector.load %arg9[%c0_21, %c0_22] : memref<1x128xf32, #tpu.memory_space<vmem>>, vector<1x128xf32>
    %29 = vector.broadcast %28 : vector<1x128xf32> to vector<8x128xf32>
    %30 = arith.addf %27, %29 : vector<8x128xf32>
    %c0_23 = arith.constant 0 : index
    %c0_24 = arith.constant 0 : index
    %31 = vector.load %arg10[%c0_23, %c0_24] : memref<8x128xf32, #tpu.memory_space<vmem>>, vector<8x128xf32>
    tpu.vector_store %arg10[%c0_23, %c0_24], %30 {strides = array<i32>} : memref<8x128xf32, #tpu.memory_space<vmem>>, vector<8x128xf32>,
    return
  }
  func.func @transform_0(%arg0: i32) -> (i32, i32) {
    %c0_i32 = arith.constant 0 : i32
    %c0_i32_0 = arith.constant 0 : i32
    return %arg0, %c0_i32 : i32, i32
  }
  func.func @transform_1(%arg0: i32) -> (i32, i32) {
    %c0_i32 = arith.constant 0 : i32
    %c0_i32_0 = arith.constant 0 : i32
    %c0_i32_1 = arith.constant 0 : i32
    return %c0_i32, %c0_i32_0 : i32, i32
  }
  func.func @transform_2(%arg0: i32) -> (i32, i32) {
    %c0_i32 = arith.constant 0 : i32
    %c0_i32_0 = arith.constant 0 : i32
    %c0_i32_1 = arith.constant 0 : i32
    return %c0_i32, %c0_i32_0 : i32, i32
  }
  func.func @transform_3(%arg0: i32) -> (i32, i32) {
    %c0_i32 = arith.constant 0 : i32
    %c0_i32_0 = arith.constant 0 : i32
    %c0_i32_1 = arith.constant 0 : i32
    return %c0_i32, %c0_i32_0 : i32, i32
  }
  func.func @transform_4(%arg0: i32) -> (i32, i32) {
    %c0_i32 = arith.constant 0 : i32
    %c0_i32_0 = arith.constant 0 : i32
    %c0_i32_1 = arith.constant 0 : i32
    return %c0_i32, %c0_i32_0 : i32, i32
  }
  func.func @transform_5(%arg0: i32) -> (i32, i32) {
    %c0_i32 = arith.constant 0 : i32
    %c0_i32_0 = arith.constant 0 : i32
    %c0_i32_1 = arith.constant 0 : i32
    return %c0_i32, %c0_i32_0 : i32, i32
  }
  func.func @transform_6(%arg0: i32) -> (i32, i32) {
    %c0_i32 = arith.constant 0 : i32
    %c0_i32_0 = arith.constant 0 : i32
    %c0_i32_1 = arith.constant 0 : i32
    return %c0_i32, %c0_i32_0 : i32, i32
  }
  func.func @transform_7(%arg0: i32) -> (i32, i32) {
    %c0_i32 = arith.constant 0 : i32
    %c0_i32_0 = arith.constant 0 : i32
    %c0_i32_1 = arith.constant 0 : i32
    return %c0_i32, %c0_i32_0 : i32, i32
  }
  func.func @transform_8(%arg0: i32) -> (i32, i32) {
    %c0_i32 = arith.constant 0 : i32
    %c0_i32_0 = arith.constant 0 : i32
    %c0_i32_1 = arith.constant 0 : i32
    return %c0_i32, %c0_i32_0 : i32, i32
  }
  func.func @transform_9(%arg0: i32) -> (i32, i32) {
    %c0_i32 = arith.constant 0 : i32
    %c0_i32_0 = arith.constant 0 : i32
    return %arg0, %c0_i32 : i32, i32
  }
}

</mosaic_0001>

<llo_original>
// kernel: dqn_forward.1
$region0: #{dqn_forward.1}
  #allocation0 [shape = 'u32[]', space=smem, size = 0x4, offset = 0x4, fixed_abs, tag = 'smem constant byte address 0x4 - core index']
  #allocation1 [shape = 'u32[72,128]{1,0:T(1,128)}', space=vmem, size = 0x9000, scoped, tag = 'internal scratch']
  %s0 = inlined_call_operand.hbm [shape: f32[8,32], index: 0, kind: input, shape index: {}]
  %s1 = inlined_call_operand.hbm [shape: bf16[32,512], index: 1, kind: input, shape index: {}]
  %s2 = inlined_call_operand.hbm [shape: f32[1,512], index: 2, kind: input, shape index: {}]
  %s3 = inlined_call_operand.hbm [shape: bf16[512,256], index: 3, kind: input, shape index: {}]
  %s4 = inlined_call_operand.vmem [shape: f32[1,256], index: 4, kind: input, shape index: {}]
  %s5 = inlined_call_operand.hbm [shape: bf16[256,128], index: 5, kind: input, shape index: {}]
  %s6 = inlined_call_operand.vmem [shape: f32[1,128], index: 6, kind: input, shape index: {}]
  %s7 = inlined_call_operand.hbm [shape: bf16[128,128], index: 7, kind: input, shape index: {}]
  %s8 = inlined_call_operand.vmem [shape: f32[1,128], index: 8, kind: input, shape index: {}]
  %s9 = inlined_call_operand.hbm [shape: f32[8,128], index: 9, kind: output, shape index: {}]
  %s10 = sld [smem:[#allocation0]]
  $region70: #{dqn_forward.1} parent=0
    _
  %s12 = ssub.s32 1, %s10
  %s13 = scalar_select 0, %s12, %s10
  $region1: #{dqn_forward.1} parent=0
    #allocation2 [shape = 'u8[4096]{0}', space=vmem, size = 0x1000, scoped, tag = 'input window, operand 0, single buffered']
    #allocation3 [shape = 's32[1]{0}', space=sflag, size = 0x4, scoped, tag = 'scoped memory for dqn_forward.1']
    #allocation4 [shape = 's32[1]{0}', space=sflag, size = 0x4, scoped, tag = 'scoped memory for dqn_forward.1']
    #allocation5 [shape = 'u8[32768]{0}', space=vmem, size = 0x8000, scoped, tag = 'input window, operand 1, single buffered']
    #allocation6 [shape = 's32[1]{0}', space=sflag, size = 0x4, scoped, tag = 'scoped memory for dqn_forward.1']
    #allocation7 [shape = 'u8[2048]{0}', space=vmem, size = 0x800, scoped, tag = 'input window, operand 2, single buffered']
    #allocation8 [shape = 'u8[262144]{0}', space=vmem, size = 0x40000, scoped, tag = 'input window, operand 3, single buffered']
    #allocation9 [shape = 's32[1]{0}', space=sflag, size = 0x4, scoped, tag = 'scoped memory for dqn_forward.1']
    #allocation10 [shape = 'u8[65536]{0}', space=vmem, size = 0x10000, scoped, tag = 'input window, operand 5, single buffered']
    #allocation11 [shape = 'u8[32768]{0}', space=vmem, size = 0x8000, scoped, tag = 'input window, operand 7, single buffered']
    #allocation12 [shape = 's32[1]{0}', space=sflag, size = 0x4, scoped, tag = 'scoped memory for dqn_forward.1']
    #allocation13 [shape = 'u8[4096]{0}', space=vmem, size = 0x1000, scoped, tag = 'output window, operand 0, single buffered']
    %14 = vsyncpa [#allocation3], 0
    %15 = vsyncpa [#allocation6], 0
    %16 = vsyncpa [#allocation9], 0
    %17 = vsyncpa [#allocation12], 0
    %18 = vsyncpa [#allocation4], 0
    // Predicated region
    $region2: #{dqn_forward.1} parent=1 // pred_check
      _
    $region3: #{dqn_forward.1} parent=1 // pred_check_branch
      %20 = sbr.rel (0) target = $region5
    $region4: #{dqn_forward.1} parent=1 // pred_region
      %22 = vsyncadd [#allocation3], 0
      %s24 = sshll.u32 %s0, 4
      %s25 = int_to_ptr.hbm [resolvable:$true] %s24
      %s26 = sshll.u32 [#allocation2], 4
      %s27 = int_to_ptr.vmem [resolvable:$true] %s26
      %29 = dma.hbm_to_vmem [thread:$0]  %s25, 128, %s27, [#allocation3]
    $region5: #{dqn_forward.1} parent=1 // pred_fallthru
      _
    // Predicated region
    $region6: #{dqn_forward.1} parent=1 // pred_check
      _
    $region7: #{dqn_forward.1} parent=1 // pred_check_branch
      %31 = sbr.rel (0) target = $region9
    $region8: #{dqn_forward.1} parent=1 // pred_region
      %33 = vsyncadd [#allocation6], 0
      %s34 = sshll.u32 %s1, 4
      %s35 = int_to_ptr.hbm [resolvable:$true] %s34
      %s36 = sshll.u32 [#allocation5], 4
      %s37 = int_to_ptr.vmem [resolvable:$true] %s36
      %42 = dma.hbm_to_vmem [thread:$0]  %s35, 1024, %s37, [#allocation6], 256, 256, 16
    $region9: #{dqn_forward.1} parent=1 // pred_fallthru
      _
    // Predicated region
    $region10: #{dqn_forward.1} parent=1 // pred_check
      _
    $region11: #{dqn_forward.1} parent=1 // pred_check_branch
      %44 = sbr.rel (0) target = $region13
    $region12: #{dqn_forward.1} parent=1 // pred_region
      %46 = vsyncadd [#allocation6], 0
      %s48 = sshll.u32 %s2, 4
      %s49 = int_to_ptr.hbm [resolvable:$true] %s48
      %s50 = sshll.u32 [#allocation7], 4
      %s51 = int_to_ptr.vmem [resolvable:$true] %s50
      %53 = dma.hbm_to_vmem [thread:$0]  %s49, 64, %s51, [#allocation6]
    $region13: #{dqn_forward.1} parent=1 // pred_fallthru
      _
    // Predicated region
    $region14: #{dqn_forward.1} parent=1 // pred_check
      _
    $region15: #{dqn_forward.1} parent=1 // pred_check_branch
      %55 = sbr.rel (0) target = $region17
    $region16: #{dqn_forward.1} parent=1 // pred_region
      %57 = vsyncadd [#allocation9], 0
      %s58 = sshll.u32 %s3, 4
      %s59 = int_to_ptr.hbm [resolvable:$true] %s58
      %s60 = sshll.u32 [#allocation8], 4
      %s61 = int_to_ptr.vmem [resolvable:$true] %s60
      %66 = dma.hbm_to_vmem [thread:$0]  %s59, 8192, %s61, [#allocation9], 128, 128, 8
    $region17: #{dqn_forward.1} parent=1 // pred_fallthru
      _
    // Predicated region
    $region18: #{dqn_forward.1} parent=1 // pred_check
      _
    $region19: #{dqn_forward.1} parent=1 // pred_check_branch
      %68 = sbr.rel (0) target = $region21
    $region20: #{dqn_forward.1} parent=1 // pred_region
      _
    $region21: #{dqn_forward.1} parent=1 // pred_fallthru
      _
    // Predicated region
    $region22: #{dqn_forward.1} parent=1 // pred_check
      _
    $region23: #{dqn_forward.1} parent=1 // pred_check_branch
      %70 = sbr.rel (0) target = $region25
    $region24: #{dqn_forward.1} parent=1 // pred_region
      %72 = vsyncadd [#allocation9], 0
      %s73 = sshll.u32 %s5, 4
      %s74 = int_to_ptr.hbm [resolvable:$true] %s73
      %s75 = sshll.u32 [#allocation10], 4
      %s76 = int_to_ptr.vmem [resolvable:$true] %s75
      %81 = dma.hbm_to_vmem [thread:$0]  %s74, 2048, %s76, [#allocation9], 64, 64, 4
    $region25: #{dqn_forward.1} parent=1 // pred_fallthru
      _
    // Predicated region
    $region26: #{dqn_forward.1} parent=1 // pred_check
      _
    $region27: #{dqn_forward.1} parent=1 // pred_check_branch
      %83 = sbr.rel (0) target = $region29
    $region28: #{dqn_forward.1} parent=1 // pred_region
      _
    $region29: #{dqn_forward.1} parent=1 // pred_fallthru
      _
    // Predicated region
    $region30: #{dqn_forward.1} parent=1 // pred_check
      _
    $region31: #{dqn_forward.1} parent=1 // pred_check_branch
      %85 = sbr.rel (0) target = $region33
    $region32: #{dqn_forward.1} parent=1 // pred_region
      %87 = vsyncadd [#allocation12], 0
      %s88 = sshll.u32 %s7, 4
      %s89 = int_to_ptr.hbm [resolvable:$true] %s88
      %s90 = sshll.u32 [#allocation11], 4
      %s91 = int_to_ptr.vmem [resolvable:$true] %s90
      %96 = dma.hbm_to_vmem [thread:$0]  %s89, 1024, %s91, [#allocation12], 64, 64, 4
    $region33: #{dqn_forward.1} parent=1 // pred_fallthru
      _
    // Predicated region
    $region34: #{dqn_forward.1} parent=1 // pred_check
      _
    $region35: #{dqn_forward.1} parent=1 // pred_check_branch
      %98 = sbr.rel (0) target = $region37
    $region36: #{dqn_forward.1} parent=1 // pred_region
      _
    $region37: #{dqn_forward.1} parent=1 // pred_fallthru
      _
    // Predicated region
    $region38: #{dqn_forward.1} parent=1 // pred_check
      _
    $region39: #{dqn_forward.1} parent=1 // pred_check_branch
      %100 = sbr.rel (0) target = $region41
    $region40: #{dqn_forward.1} parent=1 // pred_region
      %102 = dma.done [#allocation3], 128
    $region41: #{dqn_forward.1} parent=1 // pred_fallthru
      _
    // Predicated region
    $region42: #{dqn_forward.1} parent=1 // pred_check
      _
    $region43: #{dqn_forward.1} parent=1 // pred_check_branch
      %104 = sbr.rel (0) target = $region45
    $region44: #{dqn_forward.1} parent=1 // pred_region
      %106 = dma.done [#allocation6], 1024
    $region45: #{dqn_forward.1} parent=1 // pred_fallthru
      _
    // Predicated region
    $region46: #{dqn_forward.1} parent=1 // pred_check
      _
    $region47: #{dqn_forward.1} parent=1 // pred_check_branch
      %108 = sbr.rel (0) target = $region49
    $region48: #{dqn_forward.1} parent=1 // pred_region
      %110 = dma.done [#allocation6], 64
    $region49: #{dqn_forward.1} parent=1 // pred_fallthru
      _
    // Predicated region
    $region50: #{dqn_forward.1} parent=1 // pred_check
      _
    $region51: #{dqn_forward.1} parent=1 // pred_check_branch
      %112 = sbr.rel (0) target = $region53
    $region52: #{dqn_forward.1} parent=1 // pred_region
      %114 = dma.done [#allocation9], 8192
    $region53: #{dqn_forward.1} parent=1 // pred_fallthru
      _
    // Predicated region
    $region54: #{dqn_forward.1} parent=1 // pred_check
      _
    $region55: #{dqn_forward.1} parent=1 // pred_check_branch
      %116 = sbr.rel (0) target = $region57
    $region56: #{dqn_forward.1} parent=1 // pred_region
      %118 = dma.done [#allocation9], 2048
    $region57: #{dqn_forward.1} parent=1 // pred_fallthru
      _
    // Predicated region
    $region58: #{dqn_forward.1} parent=1 // pred_check
      _
    $region59: #{dqn_forward.1} parent=1 // pred_check_branch
      %120 = sbr.rel (0) target = $region61
    $region60: #{dqn_forward.1} parent=1 // pred_region
      %122 = dma.done [#allocation12], 1024
    $region61: #{dqn_forward.1} parent=1 // pred_fallthru
      _
    %v124 = vld [vmem:[#allocation2] sm:$0xff]
    %v125 = vpack.c.bf16 %v124, %v124
    %v126 = vld [vmem:[#allocation5] sm:$0xff]
    %v127 = vld [vmem:[#allocation5 + $0x8] sm:$0xff]
    %v128 = vld [vmem:[#allocation5 + $0x10] sm:$0xff]
    %v129 = vld [vmem:[#allocation5 + $0x18] sm:$0xff]
    %v130 = vld [vmem:[#allocation5 + $0x20] sm:$0xff]
    %v131 = vld [vmem:[#allocation5 + $0x28] sm:$0xff]
    %v132 = vld [vmem:[#allocation5 + $0x30] sm:$0xff]
    %v133 = vld [vmem:[#allocation5 + $0x38] sm:$0xff]
    %v134 = vld [vmem:[#allocation7] sm:$0xf]
    %v136 = vperm.slane %v134, 0
    %v137 = vperm.slane %v134, 1
    %v138 = vperm.slane %v134, 2
    %v139 = vperm.slane %v134, 3
    %v152 = vunpack.c.l.b16 %v126
    %v153 = vunpack.c.h.b16 %v126
    %v154 = vunpack.c.l.b16 %v127
    %v155 = vunpack.c.h.b16 %v127
    %v156 = vunpack.c.l.b16 %v128
    %v157 = vunpack.c.h.b16 %v128
    %v158 = vunpack.c.l.b16 %v129
    %v159 = vunpack.c.h.b16 %v129
    %v160 = vunpack.c.l.b16 %v130
    %v161 = vunpack.c.h.b16 %v130
    %v162 = vunpack.c.l.b16 %v131
    %v163 = vunpack.c.h.b16 %v131
    %v164 = vunpack.c.l.b16 %v132
    %v165 = vunpack.c.h.b16 %v132
    %v166 = vunpack.c.l.b16 %v133
    %v167 = vunpack.c.h.b16 %v133
    %v168 = vpack.c.b16 %v156, %v152
    %v169 = vpack.c.b16 %v157, %v153
    %v170 = vpack.c.b16 %v158, %v154
    %v171 = vpack.c.b16 %v159, %v155
    %v172 = vpack.c.b16 %v164, %v160
    %v173 = vpack.c.b16 %v165, %v161
    %v174 = vpack.c.b16 %v166, %v162
    %v175 = vpack.c.b16 %v167, %v163
    %vm184 = vcmask 261120
    %v186 = vsel %vm184, %v125, 0
    %188 = vmatpush.bf16.msra.mxu0 0
    %189 = vmatpush.bf16.msra.mxu0 0
    %190 = vmatpush.bf16.msra.mxu0 0
    %191 = vmatpush.bf16.msra.mxu0 0
    %192 = vmatpush.bf16.msra.mxu0 0
    %193 = vmatpush.bf16.msra.mxu0 0
    %194 = vmatpush.bf16.msra.mxu0 %v172
    %195 = vmatpush.bf16.msra.mxu0 %v168
    %196 = vmatmul.bf16.gmra.mxu0 %v186
    %v197 = vpop.f32.mrf.mxu0
    %v198 = vadd.f32 %v136, %v197
    %v199 = vpop.f32.mrf.mxu0
    %200 = vdwg.mxu0
    %201 = vmatpush.bf16.msra.mxu0 0
    %202 = vmatpush.bf16.msra.mxu0 0
    %203 = vmatpush.bf16.msra.mxu0 0
    %204 = vmatpush.bf16.msra.mxu0 0
    %205 = vmatpush.bf16.msra.mxu0 0
    %206 = vmatpush.bf16.msra.mxu0 0
    %207 = vmatpush.bf16.msra.mxu0 %v173
    %208 = vmatpush.bf16.msra.mxu0 %v169
    %209 = vmatmul.bf16.gmra.mxu0 %v186
    %v210 = vpop.f32.mrf.mxu0
    %v211 = vadd.f32 %v137, %v210
    %v212 = vpop.f32.mrf.mxu0
    %213 = vdwg.mxu0
    %214 = vmatpush.bf16.msra.mxu0 0
    %215 = vmatpush.bf16.msra.mxu0 0
    %216 = vmatpush.bf16.msra.mxu0 0
    %217 = vmatpush.bf16.msra.mxu0 0
    %218 = vmatpush.bf16.msra.mxu0 0
    %219 = vmatpush.bf16.msra.mxu0 0
    %220 = vmatpush.bf16.msra.mxu0 %v174
    %221 = vmatpush.bf16.msra.mxu0 %v170
    %222 = vmatmul.bf16.gmra.mxu0 %v186
    %v223 = vpop.f32.mrf.mxu0
    %v224 = vadd.f32 %v138, %v223
    %v225 = vpop.f32.mrf.mxu0
    %226 = vdwg.mxu0
    %227 = vmatpush.bf16.msra.mxu0 0
    %228 = vmatpush.bf16.msra.mxu0 0
    %229 = vmatpush.bf16.msra.mxu0 0
    %230 = vmatpush.bf16.msra.mxu0 0
    %231 = vmatpush.bf16.msra.mxu0 0
    %232 = vmatpush.bf16.msra.mxu0 0
    %233 = vmatpush.bf16.msra.mxu0 %v175
    %234 = vmatpush.bf16.msra.mxu0 %v171
    %235 = vmatmul.bf16.gmra.mxu0 %v186
    %v236 = vpop.f32.mrf.mxu0
    %v237 = vadd.f32 %v139, %v236
    %v238 = vpop.f32.mrf.mxu0
    %239 = vdwg.mxu0
    %v240 = vmax.f32 %v198, 0.0
    %v241 = vmax.f32 %v211, 0.0
    %v242 = vmax.f32 %v224, 0.0
    %v243 = vmax.f32 %v237, 0.0
    %v244 = vpack.c.bf16 %v240, %v240
    %v245 = vpack.c.bf16 %v241, %v241
    %v246 = vpack.c.bf16 %v242, %v242
    %v247 = vpack.c.bf16 %v243, %v243
    %v248 = vld [vmem:[#allocation8] sm:$0xff]
    %v249 = vld [vmem:[#allocation8 + $0x8] sm:$0xff]
    %v250 = vld [vmem:[#allocation8 + $0x10] sm:$0xff]
    %v251 = vld [vmem:[#allocation8 + $0x18] sm:$0xff]
    %v252 = vld [vmem:[#allocation8 + $0x20] sm:$0xff]
    %v253 = vld [vmem:[#allocation8 + $0x28] sm:$0xff]
    %v254 = vld [vmem:[#allocation8 + $0x30] sm:$0xff]
    %v255 = vld [vmem:[#allocation8 + $0x38] sm:$0xff]
    %v256 = vld [vmem:[#allocation8 + $0x40] sm:$0xff]
    %v257 = vld [vmem:[#allocation8 + $0x48] sm:$0xff]
    %v258 = vld [vmem:[#allocation8 + $0x50] sm:$0xff]
    %v259 = vld [vmem:[#allocation8 + $0x58] sm:$0xff]
    %v260 = vld [vmem:[#allocation8 + $0x60] sm:$0xff]
    %v261 = vld [vmem:[#allocation8 + $0x68] sm:$0xff]
    %v262 = vld [vmem:[#allocation8 + $0x70] sm:$0xff]
    %v263 = vld [vmem:[#allocation8 + $0x78] sm:$0xff]
    %v264 = vld [vmem:[#allocation8 + $0x80] sm:$0xff]
    %v265 = vld [vmem:[#allocation8 + $0x88] sm:$0xff]
    %v266 = vld [vmem:[#allocation8 + $0x90] sm:$0xff]
    %v267 = vld [vmem:[#allocation8 + $0x98] sm:$0xff]
    %v268 = vld [vmem:[#allocation8 + $0xa0] sm:$0xff]
    %v269 = vld [vmem:[#allocation8 + $0xa8] sm:$0xff]
    %v270 = vld [vmem:[#allocation8 + $0xb0] sm:$0xff]
    %v271 = vld [vmem:[#allocation8 + $0xb8] sm:$0xff]
    %v272 = vld [vmem:[#allocation8 + $0xc0] sm:$0xff]
    %v273 = vld [vmem:[#allocation8 + $0xc8] sm:$0xff]
    %v274 = vld [vmem:[#allocation8 + $0xd0] sm:$0xff]
    %v275 = vld [vmem:[#allocation8 + $0xd8] sm:$0xff]
    %v276 = vld [vmem:[#allocation8 + $0xe0] sm:$0xff]
    %v277 = vld [vmem:[#allocation8 + $0xe8] sm:$0xff]
    %v278 = vld [vmem:[#allocation8 + $0xf0] sm:$0xff]
    %v279 = vld [vmem:[#allocation8 + $0xf8] sm:$0xff]
    %v280 = vld [vmem:[#allocation8 + $0x100] sm:$0xff]
    %v281 = vld [vmem:[#allocation8 + $0x108] sm:$0xff]
    %v282 = vld [vmem:[#allocation8 + $0x110] sm:$0xff]
    %v283 = vld [vmem:[#allocation8 + $0x118] sm:$0xff]
    %v284 = vld [vmem:[#allocation8 + $0x120] sm:$0xff]
    %v285 = vld [vmem:[#allocation8 + $0x128] sm:$0xff]
    %v286 = vld [vmem:[#allocation8 + $0x130] sm:$0xff]
    %v287 = vld [vmem:[#allocation8 + $0x138] sm:$0xff]
    %v288 = vld [vmem:[#allocation8 + $0x140] sm:$0xff]
    %v289 = vld [vmem:[#allocation8 + $0x148] sm:$0xff]
    %v290 = vld [vmem:[#allocation8 + $0x150] sm:$0xff]
    %v291 = vld [vmem:[#allocation8 + $0x158] sm:$0xff]
    %v292 = vld [vmem:[#allocation8 + $0x160] sm:$0xff]
    %v293 = vld [vmem:[#allocation8 + $0x168] sm:$0xff]
    %v294 = vld [vmem:[#allocation8 + $0x170] sm:$0xff]
    %v295 = vld [vmem:[#allocation8 + $0x178] sm:$0xff]
    %v296 = vld [vmem:[#allocation8 + $0x180] sm:$0xff]
    %v297 = vld [vmem:[#allocation8 + $0x188] sm:$0xff]
    %v298 = vld [vmem:[#allocation8 + $0x190] sm:$0xff]
    %v299 = vld [vmem:[#allocation8 + $0x198] sm:$0xff]
    %v300 = vld [vmem:[#allocation8 + $0x1a0] sm:$0xff]
    %v301 = vld [vmem:[#allocation8 + $0x1a8] sm:$0xff]
    %v302 = vld [vmem:[#allocation8 + $0x1b0] sm:$0xff]
    %v303 = vld [vmem:[#allocation8 + $0x1b8] sm:$0xff]
    %v304 = vld [vmem:[#allocation8 + $0x1c0] sm:$0xff]
    %v305 = vld [vmem:[#allocation8 + $0x1c8] sm:$0xff]
    %v306 = vld [vmem:[#allocation8 + $0x1d0] sm:$0xff]
    %v307 = vld [vmem:[#allocation8 + $0x1d8] sm:$0xff]
    %v308 = vld [vmem:[#allocation8 + $0x1e0] sm:$0xff]
    %v309 = vld [vmem:[#allocation8 + $0x1e8] sm:$0xff]
    %v310 = vld [vmem:[#allocation8 + $0x1f0] sm:$0xff]
    %v311 = vld [vmem:[#allocation8 + $0x1f8] sm:$0xff]
    %v312 = vld [vmem:[%s4] sm:$0x3]
    %v314 = vperm.slane %v312, 0
    %v315 = vperm.slane %v312, 1
    %v382 = vunpack.c.l.b16 %v248
    %v383 = vunpack.c.h.b16 %v248
    %v384 = vunpack.c.l.b16 %v249
    %v385 = vunpack.c.h.b16 %v249
    %v386 = vunpack.c.l.b16 %v250
    %v387 = vunpack.c.h.b16 %v250
    %v388 = vunpack.c.l.b16 %v251
    %v389 = vunpack.c.h.b16 %v251
    %v390 = vunpack.c.l.b16 %v252
    %v391 = vunpack.c.h.b16 %v252
    %v392 = vunpack.c.l.b16 %v253
    %v393 = vunpack.c.h.b16 %v253
    %v394 = vunpack.c.l.b16 %v254
    %v395 = vunpack.c.h.b16 %v254
    %v396 = vunpack.c.l.b16 %v255
    %v397 = vunpack.c.h.b16 %v255
    %v398 = vunpack.c.l.b16 %v256
    %v399 = vunpack.c.h.b16 %v256
    %v400 = vunpack.c.l.b16 %v257
    %v401 = vunpack.c.h.b16 %v257
    %v402 = vunpack.c.l.b16 %v258
    %v403 = vunpack.c.h.b16 %v258
    %v404 = vunpack.c.l.b16 %v259
    %v405 = vunpack.c.h.b16 %v259
    %v406 = vunpack.c.l.b16 %v260
    %v407 = vunpack.c.h.b16 %v260
    %v408 = vunpack.c.l.b16 %v261
    %v409 = vunpack.c.h.b16 %v261
    %v410 = vunpack.c.l.b16 %v262
    %v411 = vunpack.c.h.b16 %v262
    %v412 = vunpack.c.l.b16 %v263
    %v413 = vunpack.c.h.b16 %v263
    %v414 = vunpack.c.l.b16 %v264
    %v415 = vunpack.c.h.b16 %v264
    %v416 = vunpack.c.l.b16 %v265
    %v417 = vunpack.c.h.b16 %v265
    %v418 = vunpack.c.l.b16 %v266
    %v419 = vunpack.c.h.b16 %v266
    %v420 = vunpack.c.l.b16 %v267
    %v421 = vunpack.c.h.b16 %v267
    %v422 = vunpack.c.l.b16 %v268
    %v423 = vunpack.c.h.b16 %v268
    %v424 = vunpack.c.l.b16 %v269
    %v425 = vunpack.c.h.b16 %v269
    %v426 = vunpack.c.l.b16 %v270
    %v427 = vunpack.c.h.b16 %v270
    %v428 = vunpack.c.l.b16 %v271
    %v429 = vunpack.c.h.b16 %v271
    %v430 = vunpack.c.l.b16 %v272
    %v431 = vunpack.c.h.b16 %v272
    %v432 = vunpack.c.l.b16 %v273
    %v433 = vunpack.c.h.b16 %v273
    %v434 = vunpack.c.l.b16 %v274
    %v435 = vunpack.c.h.b16 %v274
    %v436 = vunpack.c.l.b16 %v275
    %v437 = vunpack.c.h.b16 %v275
    %v438 = vunpack.c.l.b16 %v276
    %v439 = vunpack.c.h.b16 %v276
    %v440 = vunpack.c.l.b16 %v277
    %v441 = vunpack.c.h.b16 %v277
    %v442 = vunpack.c.l.b16 %v278
    %v443 = vunpack.c.h.b16 %v278
    %v444 = vunpack.c.l.b16 %v279
    %v445 = vunpack.c.h.b16 %v279
    %v446 = vunpack.c.l.b16 %v280
    %v447 = vunpack.c.h.b16 %v280
    %v448 = vunpack.c.l.b16 %v281
    %v449 = vunpack.c.h.b16 %v281
    %v450 = vunpack.c.l.b16 %v282
    %v451 = vunpack.c.h.b16 %v282
    %v452 = vunpack.c.l.b16 %v283
    %v453 = vunpack.c.h.b16 %v283
    %v454 = vunpack.c.l.b16 %v284
    %v455 = vunpack.c.h.b16 %v284
    %v456 = vunpack.c.l.b16 %v285
    %v457 = vunpack.c.h.b16 %v285
    %v458 = vunpack.c.l.b16 %v286
    %v459 = vunpack.c.h.b16 %v286
    %v460 = vunpack.c.l.b16 %v287
    %v461 = vunpack.c.h.b16 %v287
    %v462 = vunpack.c.l.b16 %v288
    %v463 = vunpack.c.h.b16 %v288
    %v464 = vunpack.c.l.b16 %v289
    %v465 = vunpack.c.h.b16 %v289
    %v466 = vunpack.c.l.b16 %v290
    %v467 = vunpack.c.h.b16 %v290
    %v468 = vunpack.c.l.b16 %v291
    %v469 = vunpack.c.h.b16 %v291
    %v470 = vunpack.c.l.b16 %v292
    %v471 = vunpack.c.h.b16 %v292
    %v472 = vunpack.c.l.b16 %v293
    %v473 = vunpack.c.h.b16 %v293
    %v474 = vunpack.c.l.b16 %v294
    %v475 = vunpack.c.h.b16 %v294
    %v476 = vunpack.c.l.b16 %v295
    %v477 = vunpack.c.h.b16 %v295
    %v478 = vunpack.c.l.b16 %v296
    %v479 = vunpack.c.h.b16 %v296
    %v480 = vunpack.c.l.b16 %v297
    %v481 = vunpack.c.h.b16 %v297
    %v482 = vunpack.c.l.b16 %v298
    %v483 = vunpack.c.h.b16 %v298
    %v484 = vunpack.c.l.b16 %v299
    %v485 = vunpack.c.h.b16 %v299
    %v486 = vunpack.c.l.b16 %v300
    %v487 = vunpack.c.h.b16 %v300
    %v488 = vunpack.c.l.b16 %v301
    %v489 = vunpack.c.h.b16 %v301
    %v490 = vunpack.c.l.b16 %v302
    %v491 = vunpack.c.h.b16 %v302
    %v492 = vunpack.c.l.b16 %v303
    %v493 = vunpack.c.h.b16 %v303
    %v494 = vunpack.c.l.b16 %v304
    %v495 = vunpack.c.h.b16 %v304
    %v496 = vunpack.c.l.b16 %v305
    %v497 = vunpack.c.h.b16 %v305
    %v498 = vunpack.c.l.b16 %v306
    %v499 = vunpack.c.h.b16 %v306
    %v500 = vunpack.c.l.b16 %v307
    %v501 = vunpack.c.h.b16 %v307
    %v502 = vunpack.c.l.b16 %v308
    %v503 = vunpack.c.h.b16 %v308
    %v504 = vunpack.c.l.b16 %v309
    %v505 = vunpack.c.h.b16 %v309
    %v506 = vunpack.c.l.b16 %v310
    %v507 = vunpack.c.h.b16 %v310
    %v508 = vunpack.c.l.b16 %v311
    %v509 = vunpack.c.h.b16 %v311
    %v510 = vpack.c.b16 %v384, %v382
    %v511 = vpack.c.b16 %v385, %v383
    %v512 = vpack.c.b16 %v388, %v386
    %v513 = vpack.c.b16 %v389, %v387
    %v514 = vpack.c.b16 %v392, %v390
    %v515 = vpack.c.b16 %v393, %v391
    %v516 = vpack.c.b16 %v396, %v394
    %v517 = vpack.c.b16 %v397, %v395
    %v518 = vpack.c.b16 %v400, %v398
    %v519 = vpack.c.b16 %v401, %v399
    %v520 = vpack.c.b16 %v404, %v402
    %v521 = vpack.c.b16 %v405, %v403
    %v522 = vpack.c.b16 %v408, %v406
    %v523 = vpack.c.b16 %v409, %v407
    %v524 = vpack.c.b16 %v412, %v410
    %v525 = vpack.c.b16 %v413, %v411
    %v526 = vpack.c.b16 %v416, %v414
    %v527 = vpack.c.b16 %v417, %v415
    %v528 = vpack.c.b16 %v420, %v418
    %v529 = vpack.c.b16 %v421, %v419
    %v530 = vpack.c.b16 %v424, %v422
    %v531 = vpack.c.b16 %v425, %v423
    %v532 = vpack.c.b16 %v428, %v426
    %v533 = vpack.c.b16 %v429, %v427
    %v534 = vpack.c.b16 %v432, %v430
    %v535 = vpack.c.b16 %v433, %v431
    %v536 = vpack.c.b16 %v436, %v434
    %v537 = vpack.c.b16 %v437, %v435
    %v538 = vpack.c.b16 %v440, %v438
    %v539 = vpack.c.b16 %v441, %v439
    %v540 = vpack.c.b16 %v444, %v442
    %v541 = vpack.c.b16 %v445, %v443
    %v542 = vpack.c.b16 %v448, %v446
    %v543 = vpack.c.b16 %v449, %v447
    %v544 = vpack.c.b16 %v452, %v450
    %v545 = vpack.c.b16 %v453, %v451
    %v546 = vpack.c.b16 %v456, %v454
    %v547 = vpack.c.b16 %v457, %v455
    %v548 = vpack.c.b16 %v460, %v458
    %v549 = vpack.c.b16 %v461, %v459
    %v550 = vpack.c.b16 %v464, %v462
    %v551 = vpack.c.b16 %v465, %v463
    %v552 = vpack.c.b16 %v468, %v466
    %v553 = vpack.c.b16 %v469, %v467
    %v554 = vpack.c.b16 %v472, %v470
    %v555 = vpack.c.b16 %v473, %v471
    %v556 = vpack.c.b16 %v476, %v474
    %v557 = vpack.c.b16 %v477, %v475
    %v558 = vpack.c.b16 %v480, %v478
    %v559 = vpack.c.b16 %v481, %v479
    %v560 = vpack.c.b16 %v484, %v482
    %v561 = vpack.c.b16 %v485, %v483
    %v562 = vpack.c.b16 %v488, %v486
    %v563 = vpack.c.b16 %v489, %v487
    %v564 = vpack.c.b16 %v492, %v490
    %v565 = vpack.c.b16 %v493, %v491
    %v566 = vpack.c.b16 %v496, %v494
    %v567 = vpack.c.b16 %v497, %v495
    %v568 = vpack.c.b16 %v500, %v498
    %v569 = vpack.c.b16 %v501, %v499
    %v570 = vpack.c.b16 %v504, %v502
    %v571 = vpack.c.b16 %v505, %v503
    %v572 = vpack.c.b16 %v508, %v506
    %v573 = vpack.c.b16 %v509, %v507
    %638 = vmatpush.bf16.msra.mxu0 %v524
    %639 = vmatpush.bf16.msra.mxu0 %v522
    %640 = vmatpush.bf16.msra.mxu0 %v520
    %641 = vmatpush.bf16.msra.mxu0 %v518
    %642 = vmatpush.bf16.msra.mxu0 %v516
    %643 = vmatpush.bf16.msra.mxu0 %v514
    %644 = vmatpush.bf16.msra.mxu0 %v512
    %645 = vmatpush.bf16.msra.mxu0 %v510
    %646 = vmatmul.bf16.gmra.mxu0 %v244
    %v647 = vpop.f32.mrf.mxu0
    %v648 = vadd.f32 %v314, %v647
    %v649 = vpop.f32.mrf.mxu0
    %650 = vdwg.mxu0
    %651 = vmatpush.bf16.msra.mxu0 %v540
    %652 = vmatpush.bf16.msra.mxu0 %v538
    %653 = vmatpush.bf16.msra.mxu0 %v536
    %654 = vmatpush.bf16.msra.mxu0 %v534
    %655 = vmatpush.bf16.msra.mxu0 %v532
    %656 = vmatpush.bf16.msra.mxu0 %v530
    %657 = vmatpush.bf16.msra.mxu0 %v528
    %658 = vmatpush.bf16.msra.mxu0 %v526
    %659 = vmatmul.bf16.gmra.mxu0 %v245
    %v660 = vpop.f32.mrf.mxu0
    %v661 = vadd.f32 %v648, %v660
    %v662 = vpop.f32.mrf.mxu0
    %663 = vdwg.mxu0
    %664 = vmatpush.bf16.msra.mxu0 %v556
    %665 = vmatpush.bf16.msra.mxu0 %v554
    %666 = vmatpush.bf16.msra.mxu0 %v552
    %667 = vmatpush.bf16.msra.mxu0 %v550
    %668 = vmatpush.bf16.msra.mxu0 %v548
    %669 = vmatpush.bf16.msra.mxu0 %v546
    %670 = vmatpush.bf16.msra.mxu0 %v544
    %671 = vmatpush.bf16.msra.mxu0 %v542
    %672 = vmatmul.bf16.gmra.mxu0 %v246
    %v673 = vpop.f32.mrf.mxu0
    %v674 = vadd.f32 %v661, %v673
    %v675 = vpop.f32.mrf.mxu0
    %676 = vdwg.mxu0
    %677 = vmatpush.bf16.msra.mxu0 %v572
    %678 = vmatpush.bf16.msra.mxu0 %v570
    %679 = vmatpush.bf16.msra.mxu0 %v568
    %680 = vmatpush.bf16.msra.mxu0 %v566
    %681 = vmatpush.bf16.msra.mxu0 %v564
    %682 = vmatpush.bf16.msra.mxu0 %v562
    %683 = vmatpush.bf16.msra.mxu0 %v560
    %684 = vmatpush.bf16.msra.mxu0 %v558
    %685 = vmatmul.bf16.gmra.mxu0 %v247
    %v686 = vpop.f32.mrf.mxu0
    %v687 = vadd.f32 %v674, %v686
    %v688 = vpop.f32.mrf.mxu0
    %689 = vdwg.mxu0
    %690 = vmatpush.bf16.msra.mxu0 %v525
    %691 = vmatpush.bf16.msra.mxu0 %v523
    %692 = vmatpush.bf16.msra.mxu0 %v521
    %693 = vmatpush.bf16.msra.mxu0 %v519
    %694 = vmatpush.bf16.msra.mxu0 %v517
    %695 = vmatpush.bf16.msra.mxu0 %v515
    %696 = vmatpush.bf16.msra.mxu0 %v513
    %697 = vmatpush.bf16.msra.mxu0 %v511
    %698 = vmatmul.bf16.gmra.mxu0 %v244
    %v699 = vpop.f32.mrf.mxu0
    %v700 = vadd.f32 %v315, %v699
    %v701 = vpop.f32.mrf.mxu0
    %702 = vdwg.mxu0
    %703 = vmatpush.bf16.msra.mxu0 %v541
    %704 = vmatpush.bf16.msra.mxu0 %v539
    %705 = vmatpush.bf16.msra.mxu0 %v537
    %706 = vmatpush.bf16.msra.mxu0 %v535
    %707 = vmatpush.bf16.msra.mxu0 %v533
    %708 = vmatpush.bf16.msra.mxu0 %v531
    %709 = vmatpush.bf16.msra.mxu0 %v529
    %710 = vmatpush.bf16.msra.mxu0 %v527
    %711 = vmatmul.bf16.gmra.mxu0 %v245
    %v712 = vpop.f32.mrf.mxu0
    %v713 = vadd.f32 %v700, %v712
    %v714 = vpop.f32.mrf.mxu0
    %715 = vdwg.mxu0
    %716 = vmatpush.bf16.msra.mxu0 %v557
    %717 = vmatpush.bf16.msra.mxu0 %v555
    %718 = vmatpush.bf16.msra.mxu0 %v553
    %719 = vmatpush.bf16.msra.mxu0 %v551
    %720 = vmatpush.bf16.msra.mxu0 %v549
    %721 = vmatpush.bf16.msra.mxu0 %v547
    %722 = vmatpush.bf16.msra.mxu0 %v545
    %723 = vmatpush.bf16.msra.mxu0 %v543
    %724 = vmatmul.bf16.gmra.mxu0 %v246
    %v725 = vpop.f32.mrf.mxu0
    %v726 = vadd.f32 %v713, %v725
    %v727 = vpop.f32.mrf.mxu0
    %728 = vdwg.mxu0
    %729 = vmatpush.bf16.msra.mxu0 %v573
    %730 = vmatpush.bf16.msra.mxu0 %v571
    %731 = vmatpush.bf16.msra.mxu0 %v569
    %732 = vmatpush.bf16.msra.mxu0 %v567
    %733 = vmatpush.bf16.msra.mxu0 %v565
    %734 = vmatpush.bf16.msra.mxu0 %v563
    %735 = vmatpush.bf16.msra.mxu0 %v561
    %736 = vmatpush.bf16.msra.mxu0 %v559
    %737 = vmatmul.bf16.gmra.mxu0 %v247
    %v738 = vpop.f32.mrf.mxu0
    %v739 = vadd.f32 %v726, %v738
    %v740 = vpop.f32.mrf.mxu0
    %741 = vdwg.mxu0
    %v742 = vmax.f32 %v687, 0.0
    %v743 = vmax.f32 %v739, 0.0
    %v744 = vpack.c.bf16 %v742, %v742
    %v745 = vpack.c.bf16 %v743, %v743
    %v746 = vld [vmem:[#allocation10] sm:$0xf]
    %v747 = vld [vmem:[#allocation10 + $0x4] sm:$0xf]
    %v748 = vld [vmem:[#allocation10 + $0x8] sm:$0xf]
    %v749 = vld [vmem:[#allocation10 + $0xc] sm:$0xf]
    %v750 = vld [vmem:[#allocation10 + $0x10] sm:$0xf]
    %v751 = vld [vmem:[#allocation10 + $0x14] sm:$0xf]
    %v752 = vld [vmem:[#allocation10 + $0x18] sm:$0xf]
    %v753 = vld [vmem:[#allocation10 + $0x1c] sm:$0xf]
    %v754 = vld [vmem:[#allocation10 + $0x20] sm:$0xf]
    %v755 = vld [vmem:[#allocation10 + $0x24] sm:$0xf]
    %v756 = vld [vmem:[#allocation10 + $0x28] sm:$0xf]
    %v757 = vld [vmem:[#allocation10 + $0x2c] sm:$0xf]
    %v758 = vld [vmem:[#allocation10 + $0x30] sm:$0xf]
    %v759 = vld [vmem:[#allocation10 + $0x34] sm:$0xf]
    %v760 = vld [vmem:[#allocation10 + $0x38] sm:$0xf]
    %v761 = vld [vmem:[#allocation10 + $0x3c] sm:$0xf]
    %v762 = vld [vmem:[#allocation10 + $0x40] sm:$0xf]
    %v763 = vld [vmem:[#allocation10 + $0x44] sm:$0xf]
    %v764 = vld [vmem:[#allocation10 + $0x48] sm:$0xf]
    %v765 = vld [vmem:[#allocation10 + $0x4c] sm:$0xf]
    %v766 = vld [vmem:[#allocation10 + $0x50] sm:$0xf]
    %v767 = vld [vmem:[#allocation10 + $0x54] sm:$0xf]
    %v768 = vld [vmem:[#allocation10 + $0x58] sm:$0xf]
    %v769 = vld [vmem:[#allocation10 + $0x5c] sm:$0xf]
    %v770 = vld [vmem:[#allocation10 + $0x60] sm:$0xf]
    %v771 = vld [vmem:[#allocation10 + $0x64] sm:$0xf]
    %v772 = vld [vmem:[#allocation10 + $0x68] sm:$0xf]
    %v773 = vld [vmem:[#allocation10 + $0x6c] sm:$0xf]
    %v774 = vld [vmem:[#allocation10 + $0x70] sm:$0xf]
    %v775 = vld [vmem:[#allocation10 + $0x74] sm:$0xf]
    %v776 = vld [vmem:[#allocation10 + $0x78] sm:$0xf]
    %v777 = vld [vmem:[#allocation10 + $0x7c] sm:$0xf]
    %v778 = vld [vmem:[%s6] sm:$0x1]
    %v780 = vperm.slane %v778, 0
    %v814 = vunpack.c.l.b16 %v746
    %v815 = vunpack.c.l.b16 %v747
    %v816 = vunpack.c.l.b16 %v748
    %v817 = vunpack.c.l.b16 %v749
    %v818 = vunpack.c.l.b16 %v750
    %v819 = vunpack.c.l.b16 %v751
    %v820 = vunpack.c.l.b16 %v752
    %v821 = vunpack.c.l.b16 %v753
    %v822 = vunpack.c.l.b16 %v754
    %v823 = vunpack.c.l.b16 %v755
    %v824 = vunpack.c.l.b16 %v756
    %v825 = vunpack.c.l.b16 %v757
    %v826 = vunpack.c.l.b16 %v758
    %v827 = vunpack.c.l.b16 %v759
    %v828 = vunpack.c.l.b16 %v760
    %v829 = vunpack.c.l.b16 %v761
    %v830 = vunpack.c.l.b16 %v762
    %v831 = vunpack.c.l.b16 %v763
    %v832 = vunpack.c.l.b16 %v764
    %v833 = vunpack.c.l.b16 %v765
    %v834 = vunpack.c.l.b16 %v766
    %v835 = vunpack.c.l.b16 %v767
    %v836 = vunpack.c.l.b16 %v768
    %v837 = vunpack.c.l.b16 %v769
    %v838 = vunpack.c.l.b16 %v770
    %v839 = vunpack.c.l.b16 %v771
    %v840 = vunpack.c.l.b16 %v772
    %v841 = vunpack.c.l.b16 %v773
    %v842 = vunpack.c.l.b16 %v774
    %v843 = vunpack.c.l.b16 %v775
    %v844 = vunpack.c.l.b16 %v776
    %v845 = vunpack.c.l.b16 %v777
    %v846 = vpack.c.b16 %v815, %v814
    %v847 = vpack.c.b16 %v817, %v816
    %v848 = vpack.c.b16 %v819, %v818
    %v849 = vpack.c.b16 %v821, %v820
    %v850 = vpack.c.b16 %v823, %v822
    %v851 = vpack.c.b16 %v825, %v824
    %v852 = vpack.c.b16 %v827, %v826
    %v853 = vpack.c.b16 %v829, %v828
    %v854 = vpack.c.b16 %v831, %v830
    %v855 = vpack.c.b16 %v833, %v832
    %v856 = vpack.c.b16 %v835, %v834
    %v857 = vpack.c.b16 %v837, %v836
    %v858 = vpack.c.b16 %v839, %v838
    %v859 = vpack.c.b16 %v841, %v840
    %v860 = vpack.c.b16 %v843, %v842
    %v861 = vpack.c.b16 %v845, %v844
    %878 = vmatpush.bf16.msra.mxu0 %v853
    %879 = vmatpush.bf16.msra.mxu0 %v852
    %880 = vmatpush.bf16.msra.mxu0 %v851
    %881 = vmatpush.bf16.msra.mxu0 %v850
    %882 = vmatpush.bf16.msra.mxu0 %v849
    %883 = vmatpush.bf16.msra.mxu0 %v848
    %884 = vmatpush.bf16.msra.mxu0 %v847
    %885 = vmatpush.bf16.msra.mxu0 %v846
    %886 = vmatmul.bf16.gmra.mxu0 %v744
    %v887 = vpop.f32.mrf.mxu0
    %v888 = vadd.f32 %v780, %v887
    %v889 = vpop.f32.mrf.mxu0
    %890 = vdwg.mxu0
    %891 = vmatpush.bf16.msra.mxu0 %v861
    %892 = vmatpush.bf16.msra.mxu0 %v860
    %893 = vmatpush.bf16.msra.mxu0 %v859
    %894 = vmatpush.bf16.msra.mxu0 %v858
    %895 = vmatpush.bf16.msra.mxu0 %v857
    %896 = vmatpush.bf16.msra.mxu0 %v856
    %897 = vmatpush.bf16.msra.mxu0 %v855
    %898 = vmatpush.bf16.msra.mxu0 %v854
    %899 = vmatmul.bf16.gmra.mxu0 %v745
    %v900 = vpop.f32.mrf.mxu0
    %v901 = vadd.f32 %v888, %v900
    %v902 = vpop.f32.mrf.mxu0
    %903 = vdwg.mxu0
    %v904 = vmax.f32 %v901, 0.0
    %v905 = vpack.c.bf16 %v904, %v904
    %v906 = vld [vmem:[#allocation11] sm:$0xf]
    %v907 = vld [vmem:[#allocation11 + $0x4] sm:$0xf]
    %v908 = vld [vmem:[#allocation11 + $0x8] sm:$0xf]
    %v909 = vld [vmem:[#allocation11 + $0xc] sm:$0xf]
    %v910 = vld [vmem:[#allocation11 + $0x10] sm:$0xf]
    %v911 = vld [vmem:[#allocation11 + $0x14] sm:$0xf]
    %v912 = vld [vmem:[#allocation11 + $0x18] sm:$0xf]
    %v913 = vld [vmem:[#allocation11 + $0x1c] sm:$0xf]
    %v914 = vld [vmem:[#allocation11 + $0x20] sm:$0xf]
    %v915 = vld [vmem:[#allocation11 + $0x24] sm:$0xf]
    %v916 = vld [vmem:[#allocation11 + $0x28] sm:$0xf]
    %v917 = vld [vmem:[#allocation11 + $0x2c] sm:$0xf]
    %v918 = vld [vmem:[#allocation11 + $0x30] sm:$0xf]
    %v919 = vld [vmem:[#allocation11 + $0x34] sm:$0xf]
    %v920 = vld [vmem:[#allocation11 + $0x38] sm:$0xf]
    %v921 = vld [vmem:[#allocation11 + $0x3c] sm:$0xf]
    %v922 = vld [vmem:[%s8] sm:$0x1]
    %v924 = vperm.slane %v922, 0
    %v942 = vunpack.c.l.b16 %v906
    %v943 = vunpack.c.l.b16 %v907
    %v944 = vunpack.c.l.b16 %v908
    %v945 = vunpack.c.l.b16 %v909
    %v946 = vunpack.c.l.b16 %v910
    %v947 = vunpack.c.l.b16 %v911
    %v948 = vunpack.c.l.b16 %v912
    %v949 = vunpack.c.l.b16 %v913
    %v950 = vunpack.c.l.b16 %v914
    %v951 = vunpack.c.l.b16 %v915
    %v952 = vunpack.c.l.b16 %v916
    %v953 = vunpack.c.l.b16 %v917
    %v954 = vunpack.c.l.b16 %v918
    %v955 = vunpack.c.l.b16 %v919
    %v956 = vunpack.c.l.b16 %v920
    %v957 = vunpack.c.l.b16 %v921
    %v958 = vpack.c.b16 %v943, %v942
    %v959 = vpack.c.b16 %v945, %v944
    %v960 = vpack.c.b16 %v947, %v946
    %v961 = vpack.c.b16 %v949, %v948
    %v962 = vpack.c.b16 %v951, %v950
    %v963 = vpack.c.b16 %v953, %v952
    %v964 = vpack.c.b16 %v955, %v954
    %v965 = vpack.c.b16 %v957, %v956
    %974 = vmatpush.bf16.msra.mxu0 %v965
    %975 = vmatpush.bf16.msra.mxu0 %v964
    %976 = vmatpush.bf16.msra.mxu0 %v963
    %977 = vmatpush.bf16.msra.mxu0 %v962
    %978 = vmatpush.bf16.msra.mxu0 %v961
    %979 = vmatpush.bf16.msra.mxu0 %v960
    %980 = vmatpush.bf16.msra.mxu0 %v959
    %981 = vmatpush.bf16.msra.mxu0 %v958
    %982 = vmatmul.bf16.gmra.mxu0 %v905
    %v983 = vpop.f32.mrf.mxu0
    %v984 = vadd.f32 %v924, %v983
    %v985 = vpop.f32.mrf.mxu0
    %986 = vdwg.mxu0
    %987 = vst [vmem:[#allocation13] sm:$0xff] %v984
    // Predicated region
    $region62: #{dqn_forward.1} parent=1 // pred_check
      _
    $region63: #{dqn_forward.1} parent=1 // pred_check_branch
      %989 = sbr.rel (0) target = $region65
    $region64: #{dqn_forward.1} parent=1 // pred_region
      %991 = vsyncadd [#allocation4], 0
      %s993 = sshll.u32 [#allocation13], 4
      %s994 = int_to_ptr.vmem [resolvable:$true] %s993
      %s995 = sshll.u32 %s9, 4
      %s996 = int_to_ptr.hbm [resolvable:$true] %s995
      %998 = dma.vmem_to_hbm [thread:$0]  %s994, 128, %s996, [#allocation4]
    $region65: #{dqn_forward.1} parent=1 // pred_fallthru
      _
    // Predicated region
    $region66: #{dqn_forward.1} parent=1 // pred_check
      _
    $region67: #{dqn_forward.1} parent=1 // pred_check_branch
      %1000 = sbr.rel (0) target = $region69
    $region68: #{dqn_forward.1} parent=1 // pred_region
      %1002 = dma.done [#allocation4], 128
    $region69: #{dqn_forward.1} parent=1 // pred_fallthru
      _
    %1003 = vsyncpa [#allocation3], 1
    %1004 = vsyncpa [#allocation6], 1
    %1005 = vsyncpa [#allocation9], 1
    %1006 = vsyncpa [#allocation12], 1
    %1007 = vsyncpa [#allocation4], 1

</llo_original>
